<compile_context>
chip_gen: v7x
topology: tpu7x:2x2x1
jax: 0.10.0
libtpu: 0.0.40
codegen_flags: <defaults>
</compile_context>

<pallas_src>
import functools

import jax
import jax.numpy as jnp
from jax import lax
from jax.experimental import pallas as pl
from jax.experimental.pallas import tpu as pltpu


def mlp_seq_kernel(xt_ref, w1t_ref, b1_ref, w2_ref, b2_ref, o_ref, *, chunk):
    """One batch tile of y = tanh(relu(x @ W1 + b1) @ W2 + b2), batch on lanes.

    xt_ref : (K, TM)  x^T                 (batch on the lane axis)
    w1t_ref: (H, K)   W1^T                (columns are rank-1 update vectors)
    b1_ref : (H, 1)
    w2_ref : (H, 1)   W2 column           (out_features == 1)
    b2_ref : (1,)     scalar bias in SMEM
    o_ref  : (1, TM)  y^T                 (lane-dense output row)
    """
    k_dim = xt_ref.shape[0]
    h_dim = w1t_ref.shape[0]
    tm = xt_ref.shape[1]
    n_chunks = tm // chunk

    # Hoisted, chunk-invariant operands: lane-broadcasts of the parameter
    # columns and the SMEM scalar read (do NOT re-emit these per chunk).
    b1_b = jnp.broadcast_to(b1_ref[...], (h_dim, chunk))
    w2_b = jnp.broadcast_to(w2_ref[...], (h_dim, chunk))
    w1_b = [jnp.broadcast_to(w1t_ref[:, k:k + 1], (h_dim, chunk))
            for k in range(k_dim)]
    b2 = b2_ref[0]

    def body(c, carry):
        j = pl.multiple_of(c * chunk, chunk)
        xc = xt_ref[:, pl.ds(j, chunk)]                   # (K, chunk)

        # Linear(K, H): K rank-1 broadcast-FMAs on the VPU (K is tiny; an MXU
        # matmul would idle >98% of the systolic array), f32 accumulate.
        h = b1_b + w1_b[0] * xc[0:1, :]                   # (H, chunk)
        for k in range(1, k_dim):
            h = h + w1_b[k] * xc[k:k + 1, :]

        # ReLU()
        h = jnp.maximum(h, 0.0)

        # Linear(H, 1): VPU multiply + sublane (H-axis) reduce -> (1, chunk).
        y = jnp.sum(h * w2_b, axis=0, keepdims=True)

        # Tanh() on the EUP over a lane-dense row; unmasked lane-dense store.
        o_ref[:, pl.ds(j, chunk)] = jnp.tanh(y + b2).astype(o_ref.dtype)
        return carry

    lax.fori_loop(0, n_chunks, body, 0, unroll=True)


def _round_up(n, m):
    return (n + m - 1) // m * m


def sequential_forward(x, w1, b1, w2, b2, *, tm=None, chunk=256):
    """Sequential(Linear, ReLU, Linear, Tanh).forward(x) as one Pallas kernel."""
    B, K = x.shape
    H = w1.shape[1]
    O = w2.shape[1]
    if O != 1:
        # TODO(synk): epilogue is specialized to out_features == 1 (the
        # docstring example); a general O would use an MXU dot for Linear #2.
        raise NotImplementedError("kernel specialized to out_features == 1")

    LANE = 128
    if tm is None:
        b_lane = _round_up(B, LANE)
        tm = min(4096, b_lane)                       # big tile: amortize step overhead
        if b_lane >= 2 * LANE:
            # Keep >=2 grid steps so the "parallel" batch axis can shard across
            # the two v7x TensorCores instead of idling half the chip.
            tm = min(tm, _round_up(pl.cdiv(b_lane, 2), LANE))
    tm = max(LANE, _round_up(tm, LANE))

    # Inner compute-chunk (lane) width; must divide tm (tm is a multiple of 128).
    chunk = min(chunk, tm)
    if tm % chunk != 0:
        chunk = LANE

    b_pad = _round_up(B, tm)
    if b_pad != B:
        x = jnp.pad(x, ((0, b_pad - B), (0, 0)))

    # Wrapper-side layout plumbing (free): batch on lanes, params as columns.
    xt = x.astype(jnp.float32).T                       # (K, B_pad)
    w1t = w1.astype(jnp.float32).T                     # (H, K)
    b1_col = b1.reshape(H, 1).astype(jnp.float32)      # (H, 1)
    w2_col = w2.reshape(H, 1).astype(jnp.float32)      # (H, 1)
    b2_sc = b2.reshape(1).astype(jnp.float32)          # (1,) scalar -> SMEM

    kernel = functools.partial(mlp_seq_kernel, chunk=chunk)

    out = pl.pallas_call(
        kernel,
        out_shape=jax.ShapeDtypeStruct((1, b_pad), jnp.float32),
        grid=(b_pad // tm,),
        in_specs=[
            pl.BlockSpec((K, tm), lambda i: (0, i)),            # x^T: tiled over batch lanes
            pl.BlockSpec((H, K), lambda i: (0, 0)),             # W1^T: resident
            pl.BlockSpec((H, 1), lambda i: (0, 0)),             # b1: resident
            pl.BlockSpec((H, 1), lambda i: (0, 0)),             # W2 column: resident
            pl.BlockSpec(memory_space=pltpu.MemorySpace.SMEM),  # b2 scalar
        ],
        out_specs=pl.BlockSpec((1, tm), lambda i: (0, i)),      # lane-dense output row
        compiler_params=pltpu.CompilerParams(
            dimension_semantics=("parallel",)),
    )(xt, w1t, b1_col, w2_col, b2_sc)

    return out[0, :B].reshape(B, O)


def reference_forward(x, w1, b1, w2, b2):
    h = jnp.maximum(x @ w1 + b1, 0.0)
    return jnp.tanh(h @ w2 + b2)


if __name__ == "__main__":
    key = jax.random.PRNGKey(0)
    k_x, k_w1, k_b1, k_w2, k_b2 = jax.random.split(key, 5)

    batch, d_in, d_hidden, d_out = 8, 2, 128, 1

    x = jax.random.normal(k_x, (batch, d_in), dtype=jnp.float32)

    # Deterministic PyTorch-Linear-style init: U(-1/sqrt(fan_in), 1/sqrt(fan_in))
    bound1 = 1.0 / jnp.sqrt(jnp.float32(d_in))
    w1 = jax.random.uniform(k_w1, (d_in, d_hidden), jnp.float32, -bound1, bound1)
    b1 = jax.random.uniform(k_b1, (d_hidden,), jnp.float32, -bound1, bound1)

    bound2 = 1.0 / jnp.sqrt(jnp.float32(d_hidden))
    w2 = jax.random.uniform(k_w2, (d_hidden, d_out), jnp.float32, -bound2, bound2)
    b2 = jax.random.uniform(k_b2, (d_out,), jnp.float32, -bound2, bound2)

    out = sequential_forward(x, w1, b1, w2, b2)
    out = jax.block_until_ready(out)

    ref = reference_forward(x, w1, b1, w2, b2)
    assert out.shape == (batch, d_out), out.shape
    assert jnp.allclose(out, ref, atol=1e-5, rtol=1e-5), "mismatch vs reference"

    print("KERNEL_OK")
</pallas_src>

<mosaic_0001>
module attributes {stable_mosaic.version = 11 : i64} {
  func.func @mlp_seq_kernel(%arg0: i32, %arg1: memref<2x128xf32, #tpu.memory_space<vmem>>, %arg2: memref<128x2xf32, #tpu.memory_space<vmem>>, %arg3: memref<128x1xf32, #tpu.memory_space<vmem>>, %arg4: memref<128x1xf32, #tpu.memory_space<vmem>>, %arg5: memref<1xf32, #tpu.memory_space<smem>>, %arg6: memref<1x128xf32, #tpu.memory_space<vmem>>) attributes {dimension_semantics = [#tpu.dimension_semantics<parallel>], iteration_bounds = array<i64: 1>, scalar_prefetch = 0 : i64, scratch_operands = 0 : i64, tpu.core_type = #tpu.core_type<tc>, window_params = [{transform_indices = @transform_0, window_bounds = array<i64: 2, 128>}, {pipeline_mode = #tpu.pipeline_mode<synchronous>, transform_indices = @transform_1, window_bounds = array<i64: 128, 2>}, {pipeline_mode = #tpu.pipeline_mode<synchronous>, transform_indices = @transform_2, window_bounds = array<i64: 128, 1>}, {pipeline_mode = #tpu.pipeline_mode<synchronous>, transform_indices = @transform_3, window_bounds = array<i64: 128, 1>}, {transform_indices = @transform_4, window_bounds = array<i64: 1>}, {transform_indices = @transform_5, window_bounds = array<i64: 1, 128>}]} {
    %c0 = arith.constant 0 : index
    %c0_0 = arith.constant 0 : index
    %0 = vector.load %arg3[%c0, %c0_0] : memref<128x1xf32, #tpu.memory_space<vmem>>, vector<128x1xf32>
    %1 = vector.shape_cast %0 : vector<128x1xf32> to vector<128x1xf32>
    %2 = vector.broadcast %1 : vector<128x1xf32> to vector<128x128xf32>
    %c0_1 = arith.constant 0 : index
    %c0_2 = arith.constant 0 : index
    %3 = vector.load %arg4[%c0_1, %c0_2] : memref<128x1xf32, #tpu.memory_space<vmem>>, vector<128x1xf32>
    %4 = vector.shape_cast %3 : vector<128x1xf32> to vector<128x1xf32>
    %5 = vector.broadcast %4 : vector<128x1xf32> to vector<128x128xf32>
    %c0_3 = arith.constant 0 : index
    %c0_4 = arith.constant 0 : index
    %6 = vector.load %arg2[%c0_3, %c0_4] : memref<128x2xf32, #tpu.memory_space<vmem>>, vector<128x1xf32>
    %7 = vector.shape_cast %6 : vector<128x1xf32> to vector<128x1xf32>
    %8 = vector.broadcast %7 : vector<128x1xf32> to vector<128x128xf32>
    %c0_5 = arith.constant 0 : index
    %c1 = arith.constant 1 : index
    %9 = vector.load %arg2[%c0_5, %c1] : memref<128x2xf32, #tpu.memory_space<vmem>>, vector<128x1xf32>
    %10 = vector.shape_cast %9 : vector<128x1xf32> to vector<128x1xf32>
    %11 = vector.broadcast %10 : vector<128x1xf32> to vector<128x128xf32>
    %c0_6 = arith.constant 0 : index
    %12 = memref.load %arg5[%c0_6] : memref<1xf32, #tpu.memory_space<smem>>
    %c0_i32 = arith.constant 0 : i32
    %c128_i32 = arith.constant 128 : i32
    %13 = arith.muli %c0_i32, %c128_i32 : i32
    %14 = tpu.assume_multiple %13, 128 : i32
    %c0_7 = arith.constant 0 : index
    %15 = arith.index_cast %14 : i32 to index
    %16 = vector.load %arg1[%c0_7, %15] : memref<2x128xf32, #tpu.memory_space<vmem>>, vector<2x128xf32>
    %17 = vector.extract_strided_slice %16 {offsets = [0, 0], sizes = [1, 128], strides = [1, 1]} : vector<2x128xf32> to vector<1x128xf32>
    %18 = vector.broadcast %17 : vector<1x128xf32> to vector<128x128xf32>
    %19 = arith.mulf %8, %18 : vector<128x128xf32>
    %20 = arith.addf %2, %19 : vector<128x128xf32>
    %21 = vector.extract_strided_slice %16 {offsets = [1, 0], sizes = [1, 128], strides = [1, 1]} : vector<2x128xf32> to vector<1x128xf32>
    %22 = vector.broadcast %21 : vector<1x128xf32> to vector<128x128xf32>
    %23 = arith.mulf %11, %22 : vector<128x128xf32>
    %24 = arith.addf %20, %23 : vector<128x128xf32>
    %cst = arith.constant 0.000000e+00 : f32
    %25 = vector.broadcast %cst : f32 to vector<128x128xf32>
    %26 = arith.maximumf %24, %25 : vector<128x128xf32>
    %27 = arith.mulf %26, %5 : vector<128x128xf32>
    %cst_8 = arith.constant dense<0.000000e+00> : vector<128xf32>
    %28 = vector.multi_reduction <add>, %27, %cst_8 [0] : vector<128x128xf32> to vector<128xf32>
    %29 = vector.shape_cast %28 : vector<128xf32> to vector<1x128xf32>
    %30 = vector.broadcast %12 : f32 to vector<1x128xf32>
    %31 = arith.addf %29, %30 : vector<1x128xf32>
    %32 = math.tanh %31 : vector<1x128xf32>
    %c0_9 = arith.constant 0 : index
    %33 = arith.index_cast %14 : i32 to index
    %34 = vector.load %arg6[%c0_9, %33] : memref<1x128xf32, #tpu.memory_space<vmem>>, vector<1x128xf32>
    tpu.vector_store %arg6[%c0_9, %33], %32 {strides = array<i32>} : memref<1x128xf32, #tpu.memory_space<vmem>>, vector<1x128xf32>,
    %c1_i32 = arith.constant 1 : i32
    return
  }
  func.func @transform_0(%arg0: i32) -> (i32, i32) {
    %c0_i32 = arith.constant 0 : i32
    %c0_i32_0 = arith.constant 0 : i32
    return %c0_i32, %arg0 : i32, i32
  }
  func.func @transform_1(%arg0: i32) -> (i32, i32) {
    %c0_i32 = arith.constant 0 : i32
    %c0_i32_0 = arith.constant 0 : i32
    %c0_i32_1 = arith.constant 0 : i32
    return %c0_i32, %c0_i32_0 : i32, i32
  }
  func.func @transform_2(%arg0: i32) -> (i32, i32) {
    %c0_i32 = arith.constant 0 : i32
    %c0_i32_0 = arith.constant 0 : i32
    %c0_i32_1 = arith.constant 0 : i32
    return %c0_i32, %c0_i32_0 : i32, i32
  }
  func.func @transform_3(%arg0: i32) -> (i32, i32) {
    %c0_i32 = arith.constant 0 : i32
    %c0_i32_0 = arith.constant 0 : i32
    %c0_i32_1 = arith.constant 0 : i32
    return %c0_i32, %c0_i32_0 : i32, i32
  }
  func.func @transform_4(%arg0: i32) -> i32 {
    %c0_i32 = arith.constant 0 : i32
    %c0_i32_0 = arith.constant 0 : i32
    return %c0_i32 : i32
  }
  func.func @transform_5(%arg0: i32) -> (i32, i32) {
    %c0_i32 = arith.constant 0 : i32
    %c0_i32_0 = arith.constant 0 : i32
    return %c0_i32, %arg0 : i32, i32
  }
}

</mosaic_0001>

<llo_original>
// kernel: tpu_custom_call.1
$region0: #{tpu_custom_call.1}
  #allocation0 [shape = 'u32[]', space=smem, size = 0x4, offset = 0x4, fixed_abs, tag = 'smem constant byte address 0x4 - core index']
  #allocation1 [shape = 'u32[144,128]{1,0:T(1,128)}', space=vmem, size = 0x12000, scoped, tag = 'internal scratch']
  #allocation2 [shape = 'f32[1]{0:T(128)S(6)}', space=smem, size = 0x200, scoped, tag = 'scoped memory for tpu_custom_call.1']
  %s0 = inlined_call_operand.vmem [shape: f32[2,128], index: 0, kind: input, shape index: {}]
  %s1 = inlined_call_operand.vmem [shape: f32[128,2], index: 1, kind: input, shape index: {}]
  %s2 = inlined_call_operand.vmem [shape: f32[128,1], index: 2, kind: input, shape index: {}]
  %s3 = inlined_call_operand.vmem [shape: f32[128,1], index: 3, kind: input, shape index: {}]
  %s4 = inlined_call_operand.<no memory space> [shape: f32[1], index: 4, kind: input, shape index: {}]
  %s5 = inlined_call_operand.hbm [shape: f32[1,128], index: 5, kind: output, shape index: {}]
  %s6 = sld [smem:[#allocation0]]
  $region30: #{tpu_custom_call.1} parent=0
    _
  %s8 = ssub.s32 1, %s6
  %s9 = scalar_select 0, %s8, %s6
  %10 = sst [smem:[#allocation2]] %s4
  $region1: #{tpu_custom_call.1} parent=0
    #allocation3 [shape = 'u8[512]{0}', space=vmem, size = 0x400, scoped, tag = 'output window, operand 0, single buffered']
    #allocation4 [shape = 's32[1]{0}', space=sflag, size = 0x4, scoped, tag = 'scoped memory for tpu_custom_call.1']
    %11 = vsyncpa [#allocation4], 0
    // Predicated region
    $region2: #{tpu_custom_call.1} parent=1 // pred_check
      _
    $region3: #{tpu_custom_call.1} parent=1 // pred_check_branch
      %13 = sbr.rel (0) target = $region5
    $region4: #{tpu_custom_call.1} parent=1 // pred_region
      _
    $region5: #{tpu_custom_call.1} parent=1 // pred_fallthru
      _
    // Predicated region
    $region6: #{tpu_custom_call.1} parent=1 // pred_check
      _
    $region7: #{tpu_custom_call.1} parent=1 // pred_check_branch
      %15 = sbr.rel (0) target = $region9
    $region8: #{tpu_custom_call.1} parent=1 // pred_region
      _
    $region9: #{tpu_custom_call.1} parent=1 // pred_fallthru
      _
    // Predicated region
    $region10: #{tpu_custom_call.1} parent=1 // pred_check
      _
    $region11: #{tpu_custom_call.1} parent=1 // pred_check_branch
      %17 = sbr.rel (0) target = $region13
    $region12: #{tpu_custom_call.1} parent=1 // pred_region
      _
    $region13: #{tpu_custom_call.1} parent=1 // pred_fallthru
      _
    // Predicated region
    $region14: #{tpu_custom_call.1} parent=1 // pred_check
      _
    $region15: #{tpu_custom_call.1} parent=1 // pred_check_branch
      %19 = sbr.rel (0) target = $region17
    $region16: #{tpu_custom_call.1} parent=1 // pred_region
      _
    $region17: #{tpu_custom_call.1} parent=1 // pred_fallthru
      _
    // Predicated region
    $region18: #{tpu_custom_call.1} parent=1 // pred_check
      _
    $region19: #{tpu_custom_call.1} parent=1 // pred_check_branch
      %21 = sbr.rel (0) target = $region21
    $region20: #{tpu_custom_call.1} parent=1 // pred_region
      _
    $region21: #{tpu_custom_call.1} parent=1 // pred_fallthru
      _
    %v22 = vld [vmem:[%s2] sm:$0xff]
    %v23 = vld [vmem:[%s2 + $0x8] sm:$0xff]
    %v24 = vld [vmem:[%s2 + $0x10] sm:$0xff]
    %v25 = vld [vmem:[%s2 + $0x18] sm:$0xff]
    %v26 = vld [vmem:[%s2 + $0x20] sm:$0xff]
    %v27 = vld [vmem:[%s2 + $0x28] sm:$0xff]
    %v28 = vld [vmem:[%s2 + $0x30] sm:$0xff]
    %v29 = vld [vmem:[%s2 + $0x38] sm:$0xff]
    %v30 = vld [vmem:[%s2 + $0x40] sm:$0xff]
    %v31 = vld [vmem:[%s2 + $0x48] sm:$0xff]
    %v32 = vld [vmem:[%s2 + $0x50] sm:$0xff]
    %v33 = vld [vmem:[%s2 + $0x58] sm:$0xff]
    %v34 = vld [vmem:[%s2 + $0x60] sm:$0xff]
    %v35 = vld [vmem:[%s2 + $0x68] sm:$0xff]
    %v36 = vld [vmem:[%s2 + $0x70] sm:$0xff]
    %v37 = vld [vmem:[%s2 + $0x78] sm:$0xff]
    %39 = vset.pattern.permute.xlu0 0
    %40 = vperm.xlu0 %39, %v22
    %v41 = vpop.permute.xlu0 %40
    %44 = vset.pattern.permute.xlu0 0
    %45 = vperm.xlu0 %44, %v23
    %v46 = vpop.permute.xlu0 %45
    %49 = vset.pattern.permute.xlu0 0
    %50 = vperm.xlu0 %49, %v24
    %v51 = vpop.permute.xlu0 %50
    %54 = vset.pattern.permute.xlu0 0
    %55 = vperm.xlu0 %54, %v25
    %v56 = vpop.permute.xlu0 %55
    %59 = vset.pattern.permute.xlu0 0
    %60 = vperm.xlu0 %59, %v26
    %v61 = vpop.permute.xlu0 %60
    %64 = vset.pattern.permute.xlu0 0
    %65 = vperm.xlu0 %64, %v27
    %v66 = vpop.permute.xlu0 %65
    %69 = vset.pattern.permute.xlu0 0
    %70 = vperm.xlu0 %69, %v28
    %v71 = vpop.permute.xlu0 %70
    %74 = vset.pattern.permute.xlu0 0
    %75 = vperm.xlu0 %74, %v29
    %v76 = vpop.permute.xlu0 %75
    %79 = vset.pattern.permute.xlu0 0
    %80 = vperm.xlu0 %79, %v30
    %v81 = vpop.permute.xlu0 %80
    %84 = vset.pattern.permute.xlu0 0
    %85 = vperm.xlu0 %84, %v31
    %v86 = vpop.permute.xlu0 %85
    %89 = vset.pattern.permute.xlu0 0
    %90 = vperm.xlu0 %89, %v32
    %v91 = vpop.permute.xlu0 %90
    %94 = vset.pattern.permute.xlu0 0
    %95 = vperm.xlu0 %94, %v33
    %v96 = vpop.permute.xlu0 %95
    %99 = vset.pattern.permute.xlu0 0
    %100 = vperm.xlu0 %99, %v34
    %v101 = vpop.permute.xlu0 %100
    %104 = vset.pattern.permute.xlu0 0
    %105 = vperm.xlu0 %104, %v35
    %v106 = vpop.permute.xlu0 %105
    %109 = vset.pattern.permute.xlu0 0
    %110 = vperm.xlu0 %109, %v36
    %v111 = vpop.permute.xlu0 %110
    %114 = vset.pattern.permute.xlu0 0
    %115 = vperm.xlu0 %114, %v37
    %v116 = vpop.permute.xlu0 %115
    %v118 = vld [vmem:[%s3] sm:$0xff]
    %v119 = vld [vmem:[%s3 + $0x8] sm:$0xff]
    %v120 = vld [vmem:[%s3 + $0x10] sm:$0xff]
    %v121 = vld [vmem:[%s3 + $0x18] sm:$0xff]
    %v122 = vld [vmem:[%s3 + $0x20] sm:$0xff]
    %v123 = vld [vmem:[%s3 + $0x28] sm:$0xff]
    %v124 = vld [vmem:[%s3 + $0x30] sm:$0xff]
    %v125 = vld [vmem:[%s3 + $0x38] sm:$0xff]
    %v126 = vld [vmem:[%s3 + $0x40] sm:$0xff]
    %v127 = vld [vmem:[%s3 + $0x48] sm:$0xff]
    %v128 = vld [vmem:[%s3 + $0x50] sm:$0xff]
    %v129 = vld [vmem:[%s3 + $0x58] sm:$0xff]
    %v130 = vld [vmem:[%s3 + $0x60] sm:$0xff]
    %v131 = vld [vmem:[%s3 + $0x68] sm:$0xff]
    %v132 = vld [vmem:[%s3 + $0x70] sm:$0xff]
    %v133 = vld [vmem:[%s3 + $0x78] sm:$0xff]
    %135 = vset.pattern.permute.xlu0 0
    %136 = vperm.xlu0 %135, %v118
    %v137 = vpop.permute.xlu0 %136
    %140 = vset.pattern.permute.xlu0 0
    %141 = vperm.xlu0 %140, %v119
    %v142 = vpop.permute.xlu0 %141
    %145 = vset.pattern.permute.xlu0 0
    %146 = vperm.xlu0 %145, %v120
    %v147 = vpop.permute.xlu0 %146
    %150 = vset.pattern.permute.xlu0 0
    %151 = vperm.xlu0 %150, %v121
    %v152 = vpop.permute.xlu0 %151
    %155 = vset.pattern.permute.xlu0 0
    %156 = vperm.xlu0 %155, %v122
    %v157 = vpop.permute.xlu0 %156
    %160 = vset.pattern.permute.xlu0 0
    %161 = vperm.xlu0 %160, %v123
    %v162 = vpop.permute.xlu0 %161
    %165 = vset.pattern.permute.xlu0 0
    %166 = vperm.xlu0 %165, %v124
    %v167 = vpop.permute.xlu0 %166
    %170 = vset.pattern.permute.xlu0 0
    %171 = vperm.xlu0 %170, %v125
    %v172 = vpop.permute.xlu0 %171
    %175 = vset.pattern.permute.xlu0 0
    %176 = vperm.xlu0 %175, %v126
    %v177 = vpop.permute.xlu0 %176
    %180 = vset.pattern.permute.xlu0 0
    %181 = vperm.xlu0 %180, %v127
    %v182 = vpop.permute.xlu0 %181
    %185 = vset.pattern.permute.xlu0 0
    %186 = vperm.xlu0 %185, %v128
    %v187 = vpop.permute.xlu0 %186
    %190 = vset.pattern.permute.xlu0 0
    %191 = vperm.xlu0 %190, %v129
    %v192 = vpop.permute.xlu0 %191
    %195 = vset.pattern.permute.xlu0 0
    %196 = vperm.xlu0 %195, %v130
    %v197 = vpop.permute.xlu0 %196
    %200 = vset.pattern.permute.xlu0 0
    %201 = vperm.xlu0 %200, %v131
    %v202 = vpop.permute.xlu0 %201
    %205 = vset.pattern.permute.xlu0 0
    %206 = vperm.xlu0 %205, %v132
    %v207 = vpop.permute.xlu0 %206
    %210 = vset.pattern.permute.xlu0 0
    %211 = vperm.xlu0 %210, %v133
    %v212 = vpop.permute.xlu0 %211
    %v214 = vld [vmem:[%s1] sm:$0xff]
    %v215 = vld [vmem:[%s1 + $0x8] sm:$0xff]
    %v216 = vld [vmem:[%s1 + $0x10] sm:$0xff]
    %v217 = vld [vmem:[%s1 + $0x18] sm:$0xff]
    %v218 = vld [vmem:[%s1 + $0x20] sm:$0xff]
    %v219 = vld [vmem:[%s1 + $0x28] sm:$0xff]
    %v220 = vld [vmem:[%s1 + $0x30] sm:$0xff]
    %v221 = vld [vmem:[%s1 + $0x38] sm:$0xff]
    %v222 = vld [vmem:[%s1 + $0x40] sm:$0xff]
    %v223 = vld [vmem:[%s1 + $0x48] sm:$0xff]
    %v224 = vld [vmem:[%s1 + $0x50] sm:$0xff]
    %v225 = vld [vmem:[%s1 + $0x58] sm:$0xff]
    %v226 = vld [vmem:[%s1 + $0x60] sm:$0xff]
    %v227 = vld [vmem:[%s1 + $0x68] sm:$0xff]
    %v228 = vld [vmem:[%s1 + $0x70] sm:$0xff]
    %v229 = vld [vmem:[%s1 + $0x78] sm:$0xff]
    %231 = vset.pattern.permute.xlu0 0
    %232 = vperm.xlu0 %231, %v214
    %v233 = vpop.permute.xlu0 %232
    %236 = vset.pattern.permute.xlu0 0
    %237 = vperm.xlu0 %236, %v215
    %v238 = vpop.permute.xlu0 %237
    %241 = vset.pattern.permute.xlu0 0
    %242 = vperm.xlu0 %241, %v216
    %v243 = vpop.permute.xlu0 %242
    %246 = vset.pattern.permute.xlu0 0
    %247 = vperm.xlu0 %246, %v217
    %v248 = vpop.permute.xlu0 %247
    %251 = vset.pattern.permute.xlu0 0
    %252 = vperm.xlu0 %251, %v218
    %v253 = vpop.permute.xlu0 %252
    %256 = vset.pattern.permute.xlu0 0
    %257 = vperm.xlu0 %256, %v219
    %v258 = vpop.permute.xlu0 %257
    %261 = vset.pattern.permute.xlu0 0
    %262 = vperm.xlu0 %261, %v220
    %v263 = vpop.permute.xlu0 %262
    %266 = vset.pattern.permute.xlu0 0
    %267 = vperm.xlu0 %266, %v221
    %v268 = vpop.permute.xlu0 %267
    %271 = vset.pattern.permute.xlu0 0
    %272 = vperm.xlu0 %271, %v222
    %v273 = vpop.permute.xlu0 %272
    %276 = vset.pattern.permute.xlu0 0
    %277 = vperm.xlu0 %276, %v223
    %v278 = vpop.permute.xlu0 %277
    %281 = vset.pattern.permute.xlu0 0
    %282 = vperm.xlu0 %281, %v224
    %v283 = vpop.permute.xlu0 %282
    %286 = vset.pattern.permute.xlu0 0
    %287 = vperm.xlu0 %286, %v225
    %v288 = vpop.permute.xlu0 %287
    %291 = vset.pattern.permute.xlu0 0
    %292 = vperm.xlu0 %291, %v226
    %v293 = vpop.permute.xlu0 %292
    %296 = vset.pattern.permute.xlu0 0
    %297 = vperm.xlu0 %296, %v227
    %v298 = vpop.permute.xlu0 %297
    %301 = vset.pattern.permute.xlu0 0
    %302 = vperm.xlu0 %301, %v228
    %v303 = vpop.permute.xlu0 %302
    %306 = vset.pattern.permute.xlu0 0
    %307 = vperm.xlu0 %306, %v229
    %v308 = vpop.permute.xlu0 %307
    %310 = vset.pattern.permute.xlu0 1
    %311 = vperm.xlu0 %310, %v214
    %v312 = vpop.permute.xlu0 %311
    %314 = vset.pattern.permute.xlu0 1
    %315 = vperm.xlu0 %314, %v215
    %v316 = vpop.permute.xlu0 %315
    %318 = vset.pattern.permute.xlu0 1
    %319 = vperm.xlu0 %318, %v216
    %v320 = vpop.permute.xlu0 %319
    %322 = vset.pattern.permute.xlu0 1
    %323 = vperm.xlu0 %322, %v217
    %v324 = vpop.permute.xlu0 %323
    %326 = vset.pattern.permute.xlu0 1
    %327 = vperm.xlu0 %326, %v218
    %v328 = vpop.permute.xlu0 %327
    %330 = vset.pattern.permute.xlu0 1
    %331 = vperm.xlu0 %330, %v219
    %v332 = vpop.permute.xlu0 %331
    %334 = vset.pattern.permute.xlu0 1
    %335 = vperm.xlu0 %334, %v220
    %v336 = vpop.permute.xlu0 %335
    %338 = vset.pattern.permute.xlu0 1
    %339 = vperm.xlu0 %338, %v221
    %v340 = vpop.permute.xlu0 %339
    %342 = vset.pattern.permute.xlu0 1
    %343 = vperm.xlu0 %342, %v222
    %v344 = vpop.permute.xlu0 %343
    %346 = vset.pattern.permute.xlu0 1
    %347 = vperm.xlu0 %346, %v223
    %v348 = vpop.permute.xlu0 %347
    %350 = vset.pattern.permute.xlu0 1
    %351 = vperm.xlu0 %350, %v224
    %v352 = vpop.permute.xlu0 %351
    %354 = vset.pattern.permute.xlu0 1
    %355 = vperm.xlu0 %354, %v225
    %v356 = vpop.permute.xlu0 %355
    %358 = vset.pattern.permute.xlu0 1
    %359 = vperm.xlu0 %358, %v226
    %v360 = vpop.permute.xlu0 %359
    %362 = vset.pattern.permute.xlu0 1
    %363 = vperm.xlu0 %362, %v227
    %v364 = vpop.permute.xlu0 %363
    %366 = vset.pattern.permute.xlu0 1
    %367 = vperm.xlu0 %366, %v228
    %v368 = vpop.permute.xlu0 %367
    %370 = vset.pattern.permute.xlu0 1
    %371 = vperm.xlu0 %370, %v229
    %v372 = vpop.permute.xlu0 %371
    %s374 = sld [smem:[#allocation2]]
    %v375 = vld [vmem:[%s0] sm:$0x3]
    %v376 = vlaneseq
    %v377 = vshrl.u32 %v376, 7
    %v378 = vsub.s32 0, %v377
    %v379 = vrot.slane %v375, %v378
    %v380 = vmul.f32 %v233, %v379
    %v381 = vmul.f32 %v238, %v379
    %v382 = vmul.f32 %v243, %v379
    %v383 = vmul.f32 %v248, %v379
    %v384 = vmul.f32 %v253, %v379
    %v385 = vmul.f32 %v258, %v379
    %v386 = vmul.f32 %v263, %v379
    %v387 = vmul.f32 %v268, %v379
    %v388 = vmul.f32 %v273, %v379
    %v389 = vmul.f32 %v278, %v379
    %v390 = vmul.f32 %v283, %v379
    %v391 = vmul.f32 %v288, %v379
    %v392 = vmul.f32 %v293, %v379
    %v393 = vmul.f32 %v298, %v379
    %v394 = vmul.f32 %v303, %v379
    %v395 = vmul.f32 %v308, %v379
    %v396 = vadd.f32 %v41, %v380
    %v397 = vadd.f32 %v46, %v381
    %v398 = vadd.f32 %v51, %v382
    %v399 = vadd.f32 %v56, %v383
    %v400 = vadd.f32 %v61, %v384
    %v401 = vadd.f32 %v66, %v385
    %v402 = vadd.f32 %v71, %v386
    %v403 = vadd.f32 %v76, %v387
    %v404 = vadd.f32 %v81, %v388
    %v405 = vadd.f32 %v86, %v389
    %v406 = vadd.f32 %v91, %v390
    %v407 = vadd.f32 %v96, %v391
    %v408 = vadd.f32 %v101, %v392
    %v409 = vadd.f32 %v106, %v393
    %v410 = vadd.f32 %v111, %v394
    %v411 = vadd.f32 %v116, %v395
    %v412 = vlaneseq
    %v413 = vshrl.u32 %v412, 7
    %v414 = vsub.s32 1, %v413
    %v415 = vrot.slane %v375, %v414
    %v416 = vmul.f32 %v312, %v415
    %v417 = vmul.f32 %v316, %v415
    %v418 = vmul.f32 %v320, %v415
    %v419 = vmul.f32 %v324, %v415
    %v420 = vmul.f32 %v328, %v415
    %v421 = vmul.f32 %v332, %v415
    %v422 = vmul.f32 %v336, %v415
    %v423 = vmul.f32 %v340, %v415
    %v424 = vmul.f32 %v344, %v415
    %v425 = vmul.f32 %v348, %v415
    %v426 = vmul.f32 %v352, %v415
    %v427 = vmul.f32 %v356, %v415
    %v428 = vmul.f32 %v360, %v415
    %v429 = vmul.f32 %v364, %v415
    %v430 = vmul.f32 %v368, %v415
    %v431 = vmul.f32 %v372, %v415
    %v432 = vadd.f32 %v396, %v416
    %v433 = vadd.f32 %v397, %v417
    %v434 = vadd.f32 %v398, %v418
    %v435 = vadd.f32 %v399, %v419
    %v436 = vadd.f32 %v400, %v420
    %v437 = vadd.f32 %v401, %v421
    %v438 = vadd.f32 %v402, %v422
    %v439 = vadd.f32 %v403, %v423
    %v440 = vadd.f32 %v404, %v424
    %v441 = vadd.f32 %v405, %v425
    %v442 = vadd.f32 %v406, %v426
    %v443 = vadd.f32 %v407, %v427
    %v444 = vadd.f32 %v408, %v428
    %v445 = vadd.f32 %v409, %v429
    %v446 = vadd.f32 %v410, %v430
    %v447 = vadd.f32 %v411, %v431
    %v448 = vmax.f32 %v432, 0.0
    %v449 = vmax.f32 %v433, 0.0
    %v450 = vmax.f32 %v434, 0.0
    %v451 = vmax.f32 %v435, 0.0
    %v452 = vmax.f32 %v436, 0.0
    %v453 = vmax.f32 %v437, 0.0
    %v454 = vmax.f32 %v438, 0.0
    %v455 = vmax.f32 %v439, 0.0
    %v456 = vmax.f32 %v440, 0.0
    %v457 = vmax.f32 %v441, 0.0
    %v458 = vmax.f32 %v442, 0.0
    %v459 = vmax.f32 %v443, 0.0
    %v460 = vmax.f32 %v444, 0.0
    %v461 = vmax.f32 %v445, 0.0
    %v462 = vmax.f32 %v446, 0.0
    %v463 = vmax.f32 %v447, 0.0
    %v464 = vmul.f32 %v448, %v137
    %v465 = vmul.f32 %v449, %v142
    %v466 = vmul.f32 %v450, %v147
    %v467 = vmul.f32 %v451, %v152
    %v468 = vmul.f32 %v452, %v157
    %v469 = vmul.f32 %v453, %v162
    %v470 = vmul.f32 %v454, %v167
    %v471 = vmul.f32 %v455, %v172
    %v472 = vmul.f32 %v456, %v177
    %v473 = vmul.f32 %v457, %v182
    %v474 = vmul.f32 %v458, %v187
    %v475 = vmul.f32 %v459, %v192
    %v476 = vmul.f32 %v460, %v197
    %v477 = vmul.f32 %v461, %v202
    %v478 = vmul.f32 %v462, %v207
    %v479 = vmul.f32 %v463, %v212
    %v480 = vadd.f32 %v464, %v465
    %v481 = vadd.f32 %v480, %v466
    %v482 = vadd.f32 %v481, %v467
    %v483 = vadd.f32 %v482, %v468
    %v484 = vadd.f32 %v483, %v469
    %v485 = vadd.f32 %v484, %v470
    %v486 = vadd.f32 %v485, %v471
    %v487 = vadd.f32 %v486, %v472
    %v488 = vadd.f32 %v487, %v473
    %v489 = vadd.f32 %v488, %v474
    %v490 = vadd.f32 %v489, %v475
    %v491 = vadd.f32 %v490, %v476
    %v492 = vadd.f32 %v491, %v477
    %v493 = vadd.f32 %v492, %v478
    %v494 = vadd.f32 %v493, %v479
    %v495 = vrot.slane %v494, 4
    %v496 = vadd.f32 %v494, %v495
    %v497 = vrot.slane %v496, 2
    %v498 = vadd.f32 %v496, %v497
    %v499 = vrot.slane %v498, 1
    %v500 = vadd.f32 %v498, %v499
    %v501 = vstv %s374
    %v502 = vadd.f32 %v500, %v501
    %v503 = vtanh.pop %v502
    %504 = vst [vmem:[#allocation3] sm:$0x1] %v503
    // Predicated region
    $region22: #{tpu_custom_call.1} parent=1 // pred_check
      _
    $region23: #{tpu_custom_call.1} parent=1 // pred_check_branch
      %506 = sbr.rel (0) target = $region25
    $region24: #{tpu_custom_call.1} parent=1 // pred_region
      %s508 = ssub.s32 16, 16
      %509 = vsyncadd [#allocation4], %s508
      %s511 = sshll.u32 [#allocation3], 4
      %s512 = int_to_ptr.vmem [resolvable:$true] %s511
      %514 = dma.vmem_to_hbm [thread:$0]  %s512, 16, %s5, [#allocation4]
    $region25: #{tpu_custom_call.1} parent=1 // pred_fallthru
      _
    // Predicated region
    $region26: #{tpu_custom_call.1} parent=1 // pred_check
      _
    $region27: #{tpu_custom_call.1} parent=1 // pred_check_branch
      %516 = sbr.rel (0) target = $region29
    $region28: #{tpu_custom_call.1} parent=1 // pred_region
      %517 = dma.done [#allocation4], 16
    $region29: #{tpu_custom_call.1} parent=1 // pred_fallthru
      _
    %518 = vsyncpa [#allocation4], 1

</llo_original>
